<compile_context>
chip_gen: v7x
topology: tpu7x:2x2x1
jax: 0.10.0
libtpu: 0.0.40
codegen_flags: <defaults>
</compile_context>

<pallas_src>
import functools

import jax
import jax.numpy as jnp
from jax import lax
from jax.experimental import pallas as pl
from jax.experimental.pallas import tpu as pltpu

_MIB = 1024 * 1024


def _round_up(x, n):
    return ((x + n - 1) // n) * n


def _select_tiling():
    """Generation-aware (row-tile target, vmem_limit_bytes)."""
    cap = None
    try:
        info = pltpu.get_tpu_info()
        for name in ("vmem_capacity_bytes", "vmem_size_bytes", "vmem_bytes"):
            v = getattr(info, name, None)
            if v:
                cap = int(v)
                break
    except Exception:
        cap = None

    if cap is not None and cap >= 100 * _MIB:
        # v5e / v6e class: 128 MiB physical VMEM -> largest tiles.
        tm_target, vmem_limit = 32768, 64 * _MIB
    else:
        # v7x class (64 MiB physical) or unknown chip: safe on every generation.
        tm_target, vmem_limit = 16384, 48 * _MIB
    if cap is not None:
        vmem_limit = min(vmem_limit, (cap * 3) // 4)   # headroom below physical
    return tm_target, vmem_limit


def router_kernel(hidden, x_ref, w1_ref, b1_ref, w2_ref, bsum_ref, o_ref):
    # x: (TM, emb) in its streamed dtype; the matmul runs in w1's dtype (bf16 if
    # the caller streams bf16 tokens, f32 otherwise) with f32 accumulation.
    x = x_ref[...].astype(w1_ref.dtype)

    # Fused first layer + shortcut column on the MXU: (TM, emb) @ (emb, K), K = hidden+1.
    z = jnp.dot(x, w1_ref[...], preferred_element_type=jnp.float32) + b1_ref[...]

    # ReLU on the `hidden` main-branch columns only; the last (shortcut) column
    # passes through untouched.
    col = lax.broadcasted_iota(jnp.int32, z.shape, 1)
    g = jnp.where(col < hidden, jnp.maximum(z, 0.0), z)                   # (TM, K)

    # Second layer + shortcut fold as one lane-dense contraction:
    # (1, K) . (TM, K)^T -> (1, TM), so the per-row result lands lane-major
    # (unmasked stores, no lane-padded (TM, 1) buffer).
    row = lax.dot_general(w2_ref[...], g, (((1,), (1,)), ((), ())),
                          preferred_element_type=jnp.float32)             # (1, TM)

    # Fused scalar bias (b2 + bs, SMEM) + sigmoid (EUP).
    o_ref[...] = jax.nn.sigmoid(row + bsum_ref[0, 0]).astype(o_ref.dtype)


def router_forward(tokens, params, *, block_rows=None):
    """tokens: (..., emb), any float dtype -> (..., 1) float32."""
    w1, b1, w2_row, b2, ws_row, bs = params
    emb = tokens.shape[-1]
    hidden = w1.shape[1]
    lead = tokens.shape[:-1]

    # No dtype cast, no padding here: only the (cheap) flatten.
    x = tokens.reshape(-1, emb)
    m = x.shape[0]

    # ---- fold the shortcut into the first matmul (extra column) ----------
    k_aug = hidden + 1
    w1_aug = jnp.concatenate([w1, ws_row.T], axis=1)                      # (emb, K)
    b1_aug = jnp.concatenate([b1, jnp.zeros((1, 1), b1.dtype)], axis=1)   # (1, K)
    w2_aug = jnp.concatenate([w2_row, jnp.ones((1, 1), w2_row.dtype)], axis=1)  # (1, K)
    b_sum = (b2 + bs).reshape(1, 1).astype(jnp.float32)                   # scalar, SMEM

    # bf16 tokens -> bf16 MXU matmul; everything else f32 (in-kernel cast).
    mm_dtype = jnp.bfloat16 if tokens.dtype == jnp.bfloat16 else jnp.float32
    w1_aug = w1_aug.astype(mm_dtype)
    b1_aug = b1_aug.astype(jnp.float32)
    w2_aug = w2_aug.astype(jnp.float32)

    # ---- generation-aware row tile & VMEM budget --------------------------
    tm_target, vmem_limit = _select_tiling()
    if block_rows is not None:
        tm_target = max(8, _round_up(block_rows, 8))
    # >= 2 grid steps whenever possible so the "parallel" M axis can shard
    # across v7x's two TensorCores (and keep the DMA pipeline warm).
    tm = min(tm_target, max(8, _round_up(pl.cdiv(m, 2), 8)))
    num_blocks = pl.cdiv(m, tm)          # no pad: boundary block rows are discarded

    weight_bytes = (emb * k_aug + 2 * k_aug + 1) * 4
    cost = pl.CostEstimate(
        flops=2 * m * emb * k_aug + 2 * m * k_aug,
        transcendentals=2 * m,                         # sigmoid ~ exp + reciprocal
        bytes_accessed=m * emb * x.dtype.itemsize + num_blocks * tm * 4 + weight_bytes,
    )

    out = pl.pallas_call(
        functools.partial(router_kernel, hidden),
        out_shape=jax.ShapeDtypeStruct((num_blocks, 1, tm), jnp.float32),
        grid=(num_blocks,),
        in_specs=[
            # Streamed token rows: pipelined / double-buffered by Pallas.
            pl.BlockSpec((tm, emb), lambda i: (i, 0)),
            # Weights & biases: constant block index -> stay resident in VMEM.
            pl.BlockSpec((emb, k_aug), lambda i: (0, 0)),   # w1_aug
            pl.BlockSpec((1, k_aug), lambda i: (0, 0)),     # b1_aug
            pl.BlockSpec((1, k_aug), lambda i: (0, 0)),     # w2_aug row
            # Fused scalar bias lives in SMEM.
            pl.BlockSpec(memory_space=pltpu.MemorySpace.SMEM),
        ],
        # Lane-dense output: one (1, TM) row per grid step.
        out_specs=pl.BlockSpec((None, 1, tm), lambda i: (i, 0, 0)),
        compiler_params=pltpu.CompilerParams(
            dimension_semantics=("parallel",),   # megacore-shard the M axis
            vmem_limit_bytes=vmem_limit,
        ),
        cost_estimate=cost,
    )(x, w1_aug, b1_aug, w2_aug, b_sum)

    return out.reshape(-1)[:m].reshape(lead + (1,))


def init_router_params(emb_size, key):
    """Deterministic PyTorch-style (uniform +-1/sqrt(fan_in)) init.

    Storage layout:
      w1     : (emb, hidden)  = main[0].weight.T
      b1     : (1, hidden)    = main[0].bias
      w2_row : (1, hidden)    = main[2].weight
      b2     : (1, 1)         = main[2].bias
      ws_row : (1, emb)       = shortcut.weight
      bs     : (1, 1)         = shortcut.bias
    """
    hidden = (emb_size + 1) // 2
    k1, k2, k3, k4, k5, k6 = jax.random.split(key, 6)

    def u(k, shape, fan_in):
        bound = 1.0 / jnp.sqrt(jnp.float32(fan_in))
        return jax.random.uniform(k, shape, jnp.float32, -bound, bound)

    w1 = u(k1, (emb_size, hidden), emb_size)
    b1 = u(k2, (1, hidden), emb_size)
    w2_row = u(k3, (1, hidden), hidden)
    b2 = u(k4, (1, 1), hidden)
    ws_row = u(k5, (1, emb_size), emb_size)
    bs = u(k6, (1, 1), emb_size)
    return (w1, b1, w2_row, b2, ws_row, bs)


def router_reference(tokens, params):
    """Pure-JAX reference with identical semantics (sanity check)."""
    w1, b1, w2_row, b2, ws_row, bs = params
    x = tokens.astype(jnp.float32)
    h = jnp.maximum(x @ w1 + b1, 0.0)
    main = h @ w2_row.T + b2
    short = x @ ws_row.T + bs
    return jax.nn.sigmoid(main + short)


if __name__ == "__main__":
    emb_size = 32
    batch, seq = 2, 8

    key = jax.random.PRNGKey(0)
    k_tok, k_par = jax.random.split(key)
    tokens = jax.random.normal(k_tok, (batch, seq, emb_size), jnp.float32)
    params = init_router_params(emb_size, k_par)

    fwd = jax.jit(router_forward)
    out = jax.block_until_ready(fwd(tokens, params))

    ref = router_reference(tokens, params)
    assert out.shape == (batch, seq, 1), out.shape
    assert jnp.allclose(out, ref, atol=1e-5, rtol=1e-5), "mismatch vs reference"

    print("KERNEL_OK")
</pallas_src>

<mosaic_0001>
module attributes {stable_mosaic.version = 11 : i64} {
  func.func @router_kernel(%arg0: i32, %arg1: memref<8x32xf32, #tpu.memory_space<vmem>>, %arg2: memref<32x17xf32, #tpu.memory_space<vmem>>, %arg3: memref<1x17xf32, #tpu.memory_space<vmem>>, %arg4: memref<1x17xf32, #tpu.memory_space<vmem>>, %arg5: memref<1x1xf32, #tpu.memory_space<smem>>, %arg6: memref<1x1x8xf32, #tpu.memory_space<vmem>>) attributes {dimension_semantics = [#tpu.dimension_semantics<parallel>], iteration_bounds = array<i64: 2>, scalar_prefetch = 0 : i64, scratch_operands = 0 : i64, tpu.core_type = #tpu.core_type<tc>, window_params = [{transform_indices = @transform_0, window_bounds = array<i64: 8, 32>}, {pipeline_mode = #tpu.pipeline_mode<synchronous>, transform_indices = @transform_1, window_bounds = array<i64: 32, 17>}, {pipeline_mode = #tpu.pipeline_mode<synchronous>, transform_indices = @transform_2, window_bounds = array<i64: 1, 17>}, {pipeline_mode = #tpu.pipeline_mode<synchronous>, transform_indices = @transform_3, window_bounds = array<i64: 1, 17>}, {transform_indices = @transform_4, window_bounds = array<i64: 1, 1>}, {transform_indices = @transform_5, window_bounds = array<i64: 1, 1, 8>}]} {
    %c0 = arith.constant 0 : index
    %c0_0 = arith.constant 0 : index
    %0 = vector.load %arg1[%c0, %c0_0] : memref<8x32xf32, #tpu.memory_space<vmem>>, vector<8x32xf32>
    %c0_1 = arith.constant 0 : index
    %c0_2 = arith.constant 0 : index
    %1 = vector.load %arg2[%c0_1, %c0_2] : memref<32x17xf32, #tpu.memory_space<vmem>>, vector<32x17xf32>
    %cst = arith.constant dense<0.000000e+00> : vector<8x17xf32>
    %2 = tpu.matmul %0, %1, %cst {dimension_numbers = #tpu.dot_dimension_numbers<[1], [0], [0], [1], [0, 0, 1, 1], [], []>} : vector<8x32xf32>, vector<32x17xf32>, vector<8x17xf32> -> vector<8x17xf32>
    %c0_3 = arith.constant 0 : index
    %c0_4 = arith.constant 0 : index
    %3 = vector.load %arg3[%c0_3, %c0_4] : memref<1x17xf32, #tpu.memory_space<vmem>>, vector<1x17xf32>
    %4 = vector.broadcast %3 : vector<1x17xf32> to vector<8x17xf32>
    %5 = arith.addf %2, %4 : vector<8x17xf32>
    %6 = tpu.iota {dimensions = array<i32: 1>} : vector<8x17xi32>
    %c16_i32 = arith.constant 16 : i32
    %7 = vector.broadcast %c16_i32 : i32 to vector<8x17xi32>
    %8 = arith.cmpi slt, %6, %7 : vector<8x17xi32>
    %cst_5 = arith.constant 0.000000e+00 : f32
    %9 = vector.broadcast %cst_5 : f32 to vector<8x17xf32>
    %10 = arith.maximumf %5, %9 : vector<8x17xf32>
    %11 = arith.select %8, %10, %5 : vector<8x17xi1>, vector<8x17xf32>
    %c0_6 = arith.constant 0 : index
    %c0_7 = arith.constant 0 : index
    %12 = vector.load %arg4[%c0_6, %c0_7] : memref<1x17xf32, #tpu.memory_space<vmem>>, vector<1x17xf32>
    %cst_8 = arith.constant dense<0.000000e+00> : vector<1x8xf32>
    %13 = tpu.matmul %12, %11, %cst_8 {dimension_numbers = #tpu.dot_dimension_numbers<[1], [1], [0], [0], [0, 0, 1, 0], [], []>} : vector<1x17xf32>, vector<8x17xf32>, vector<1x8xf32> -> vector<1x8xf32>
    %c0_9 = arith.constant 0 : index
    %c0_10 = arith.constant 0 : index
    %14 = memref.load %arg5[%c0_9, %c0_10] : memref<1x1xf32, #tpu.memory_space<smem>>
    %15 = vector.broadcast %14 : f32 to vector<1x8xf32>
    %16 = arith.addf %13, %15 : vector<1x8xf32>
    %17 = arith.negf %16 : vector<1x8xf32>
    %18 = math.exp %17 : vector<1x8xf32>
    %cst_11 = arith.constant 1.000000e+00 : f32
    %19 = vector.broadcast %cst_11 : f32 to vector<1x8xf32>
    %20 = arith.addf %19, %18 : vector<1x8xf32>
    %21 = arith.divf %19, %20 : vector<1x8xf32>
    %c0_12 = arith.constant 0 : index
    %c0_13 = arith.constant 0 : index
    %c0_14 = arith.constant 0 : index
    %22 = vector.load %arg6[%c0_12, %c0_13, %c0_14] : memref<1x1x8xf32, #tpu.memory_space<vmem>>, vector<1x1x8xf32>
    %23 = vector.shape_cast %22 : vector<1x1x8xf32> to vector<1x8xf32>
    %24 = vector.shape_cast %21 : vector<1x8xf32> to vector<1x1x8xf32>
    tpu.vector_store %arg6[%c0_12, %c0_13, %c0_14], %24 {strides = array<i32>} : memref<1x1x8xf32, #tpu.memory_space<vmem>>, vector<1x1x8xf32>,
    return
  }
  func.func @transform_0(%arg0: i32) -> (i32, i32) {
    %c0_i32 = arith.constant 0 : i32
    %c0_i32_0 = arith.constant 0 : i32
    return %arg0, %c0_i32 : i32, i32
  }
  func.func @transform_1(%arg0: i32) -> (i32, i32) {
    %c0_i32 = arith.constant 0 : i32
    %c0_i32_0 = arith.constant 0 : i32
    %c0_i32_1 = arith.constant 0 : i32
    return %c0_i32, %c0_i32_0 : i32, i32
  }
  func.func @transform_2(%arg0: i32) -> (i32, i32) {
    %c0_i32 = arith.constant 0 : i32
    %c0_i32_0 = arith.constant 0 : i32
    %c0_i32_1 = arith.constant 0 : i32
    return %c0_i32, %c0_i32_0 : i32, i32
  }
  func.func @transform_3(%arg0: i32) -> (i32, i32) {
    %c0_i32 = arith.constant 0 : i32
    %c0_i32_0 = arith.constant 0 : i32
    %c0_i32_1 = arith.constant 0 : i32
    return %c0_i32, %c0_i32_0 : i32, i32
  }
  func.func @transform_4(%arg0: i32) -> (i32, i32) {
    %c0_i32 = arith.constant 0 : i32
    %c0_i32_0 = arith.constant 0 : i32
    %c0_i32_1 = arith.constant 0 : i32
    return %c0_i32, %c0_i32_0 : i32, i32
  }
  func.func @transform_5(%arg0: i32) -> (i32, i32, i32) {
    %c0_i32 = arith.constant 0 : i32
    %c0_i32_0 = arith.constant 0 : i32
    %c0_i32_1 = arith.constant 0 : i32
    return %arg0, %c0_i32, %c0_i32_0 : i32, i32, i32
  }
}

</mosaic_0001>

<llo_original>
// kernel: router_forward.1
$region0: #{router_forward.1}
  #allocation0 [shape = 'u32[]', space=smem, size = 0x4, offset = 0x4, fixed_abs, tag = 'smem constant byte address 0x4 - core index']
  #allocation1 [shape = 'u32[144,128]{1,0:T(1,128)}', space=vmem, size = 0x12000, scoped, tag = 'internal scratch']
  #allocation2 [shape = 'f32[1,1]{1,0:T(1,128)S(6)}', space=smem, size = 0x200, scoped, tag = 'scoped memory for router_forward.1']
  %s0 = inlined_call_operand.vmem [shape: f32[16,32], index: 0, kind: input, shape index: {}]
  %s1 = inlined_call_operand.vmem [shape: f32[32,17], index: 1, kind: input, shape index: {}]
  %s2 = inlined_call_operand.vmem [shape: f32[1,17], index: 2, kind: input, shape index: {}]
  %s3 = inlined_call_operand.vmem [shape: f32[1,17], index: 3, kind: input, shape index: {}]
  %s4 = inlined_call_operand.<no memory space> [shape: f32[1,1], index: 4, kind: input, shape index: {}]
  %s5 = inlined_call_operand.hbm [shape: f32[2,1,8], index: 5, kind: output, shape index: {}]
  %s6 = sld [smem:[#allocation0]]
  $region53: #{router_forward.1} parent=0
    _
  %s8 = ssub.s32 1, %s6
  %s9 = scalar_select 0, %s8, %s6
  %10 = sst [smem:[#allocation2]] %s4
  $region1: #{router_forward.1} parent=0
    #allocation3 [shape = 'u8[1024]{0}', space=vmem, size = 0x400, scoped, tag = 'output window, operand 0']
    #allocation4 [shape = 's32[2]{0}', space=sflag, size = 0x8, scoped, tag = 'scoped memory for router_forward.1']
    %11 = vsyncpa [#allocation4], 0
    %s12 = scalar_lea.sflag [#allocation4], 1
    %13 = vsyncpa %s12, 0
    loop: start=0, step=1, limit=4
    $region2: #{router_forward.1} parent=1 // loop_pre_header
      _
    $region3: #{router_forward.1} parent=1 // loop_header
      %s15 = sphi 0, %s19
      %p16 = scmp.ge.s32.totalorder %s15, 4
      %s25 = sphi 0, %s27
      %s28 = sphi 0, %s25
      %s29 = sphi 0, %s28
      %s45 = sphi 0, %s29
      %s49 = sphi 0, %s49
      %s51 = sphi 0, %s49
      %s52 = sphi 0, %s51
      %s66 = sphi 0, %s52
      %s70 = sphi 0, %s70
      %s72 = sphi 0, %s70
      %s73 = sphi 0, %s72
      %s87 = sphi 0, %s73
      %s91 = sphi 0, %s91
      %s93 = sphi 0, %s91
      %s94 = sphi 0, %s93
      %s108 = sphi 0, %s94
      %s112 = sphi 0, %s112
      %s114 = sphi 0, %s112
      %s115 = sphi 0, %s114
      %s129 = sphi 0, %s115
      %s135 = sphi 0, %s137
      %s138 = sphi 0, %s135
      %s139 = sphi 0, %s138
      %s155 = sphi 0, %s139
    $region4: #{router_forward.1} parent=1 // loop_header_branch
      %18 = sbr.rel (%p16) target = $region8
    $region5: #{router_forward.1} parent=1 // loop_body
      %s20 = ssub.s32 %s15, 1
      %s21 = ssub.s32 %s15, 2
      %s22 = sadd.s32 %s15, 1
      %s23 = ssub.s32 %s15, %s22
      %p24 = scmp.eq.s32.totalorder %s23, 0
      %s26 = sadd.s32 %s25, 1
      %s27 = scalar_select %p24, %s25, %s26
      %p30 = pneg %p24
      %p31 = scmp.eq.s32.totalorder %s15, 1
      %p32 = por %p30, %p31
      %p33 = scmp.ne.s32.totalorder %s25, %s28
      %p34 = scmp.eq.s32.totalorder %s15, 0
      %p35 = por %p33, %p34
      %p36 = scmp.ne.s32.totalorder %s25, %s28
      %p37 = scmp.eq.s32.totalorder %s20, 1
      %p38 = por %p36, %p37
      %p39 = scmp.ne.s32.totalorder %s28, %s29
      %p40 = scmp.eq.s32.totalorder %s20, 0
      %p41 = por %p39, %p40
      %p42 = scmp.ne.s32.totalorder %s28, %s29
      %p43 = scmp.eq.s32.totalorder %s21, 1
      %p44 = por %p42, %p43
      %p46 = scmp.ne.s32.totalorder %s29, %s45
      %p47 = scmp.eq.s32.totalorder %s21, 0
      %p48 = por %p46, %p47
      %s50 = sadd.s32 %s49, 1
      %p53 = scmp.eq.s32.totalorder %s15, 1
      %p54 = scmp.ne.s32.totalorder %s49, %s51
      %p55 = scmp.eq.s32.totalorder %s15, 0
      %p56 = por %p54, %p55
      %p57 = scmp.ne.s32.totalorder %s49, %s51
      %p58 = scmp.eq.s32.totalorder %s20, 1
      %p59 = por %p57, %p58
      %p60 = scmp.ne.s32.totalorder %s51, %s52
      %p61 = scmp.eq.s32.totalorder %s20, 0
      %p62 = por %p60, %p61
      %p63 = scmp.ne.s32.totalorder %s51, %s52
      %p64 = scmp.eq.s32.totalorder %s21, 1
      %p65 = por %p63, %p64
      %p67 = scmp.ne.s32.totalorder %s52, %s66
      %p68 = scmp.eq.s32.totalorder %s21, 0
      %p69 = por %p67, %p68
      %s71 = sadd.s32 %s70, 1
      %p74 = scmp.eq.s32.totalorder %s15, 1
      %p75 = scmp.ne.s32.totalorder %s70, %s72
      %p76 = scmp.eq.s32.totalorder %s15, 0
      %p77 = por %p75, %p76
      %p78 = scmp.ne.s32.totalorder %s70, %s72
      %p79 = scmp.eq.s32.totalorder %s20, 1
      %p80 = por %p78, %p79
      %p81 = scmp.ne.s32.totalorder %s72, %s73
      %p82 = scmp.eq.s32.totalorder %s20, 0
      %p83 = por %p81, %p82
      %p84 = scmp.ne.s32.totalorder %s72, %s73
      %p85 = scmp.eq.s32.totalorder %s21, 1
      %p86 = por %p84, %p85
      %p88 = scmp.ne.s32.totalorder %s73, %s87
      %p89 = scmp.eq.s32.totalorder %s21, 0
      %p90 = por %p88, %p89
      %s92 = sadd.s32 %s91, 1
      %p95 = scmp.eq.s32.totalorder %s15, 1
      %p96 = scmp.ne.s32.totalorder %s91, %s93
      %p97 = scmp.eq.s32.totalorder %s15, 0
      %p98 = por %p96, %p97
      %p99 = scmp.ne.s32.totalorder %s91, %s93
      %p100 = scmp.eq.s32.totalorder %s20, 1
      %p101 = por %p99, %p100
      %p102 = scmp.ne.s32.totalorder %s93, %s94
      %p103 = scmp.eq.s32.totalorder %s20, 0
      %p104 = por %p102, %p103
      %p105 = scmp.ne.s32.totalorder %s93, %s94
      %p106 = scmp.eq.s32.totalorder %s21, 1
      %p107 = por %p105, %p106
      %p109 = scmp.ne.s32.totalorder %s94, %s108
      %p110 = scmp.eq.s32.totalorder %s21, 0
      %p111 = por %p109, %p110
      %s113 = sadd.s32 %s112, 1
      %p116 = scmp.eq.s32.totalorder %s15, 1
      %p117 = scmp.ne.s32.totalorder %s112, %s114
      %p118 = scmp.eq.s32.totalorder %s15, 0
      %p119 = por %p117, %p118
      %p120 = scmp.ne.s32.totalorder %s112, %s114
      %p121 = scmp.eq.s32.totalorder %s20, 1
      %p122 = por %p120, %p121
      %p123 = scmp.ne.s32.totalorder %s114, %s115
      %p124 = scmp.eq.s32.totalorder %s20, 0
      %p125 = por %p123, %p124
      %p126 = scmp.ne.s32.totalorder %s114, %s115
      %p127 = scmp.eq.s32.totalorder %s21, 1
      %p128 = por %p126, %p127
      %p130 = scmp.ne.s32.totalorder %s115, %s129
      %p131 = scmp.eq.s32.totalorder %s21, 0
      %p132 = por %p130, %p131
      %s133 = ssub.s32 %s15, %s22
      %p134 = scmp.eq.s32.totalorder %s133, 0
      %s136 = sadd.s32 %s135, 1
      %s137 = scalar_select %p134, %s135, %s136
      %p140 = pneg %p134
      %p141 = scmp.eq.s32.totalorder %s15, 1
      %p142 = por %p140, %p141
      %p143 = scmp.ne.s32.totalorder %s135, %s138
      %p144 = scmp.eq.s32.totalorder %s15, 0
      %p145 = por %p143, %p144
      %p146 = scmp.ne.s32.totalorder %s135, %s138
      %p147 = scmp.eq.s32.totalorder %s20, 1
      %p148 = por %p146, %p147
      %p149 = scmp.ne.s32.totalorder %s138, %s139
      %p150 = scmp.eq.s32.totalorder %s20, 0
      %p151 = por %p149, %p150
      %p152 = scmp.ne.s32.totalorder %s138, %s139
      %p153 = scmp.eq.s32.totalorder %s21, 1
      %p154 = por %p152, %p153
      %p156 = scmp.ne.s32.totalorder %s139, %s155
      %p157 = scmp.eq.s32.totalorder %s21, 0
      %p158 = por %p156, %p157
      %p159 = scmp.le.s32.totalorder 1, %s15
      %p160 = scmp.lt.s32.totalorder %s15, 3
      %p161 = pnand %p159, %p160
      %p162 = pneg %p161
      // Predicated region
      $region9: #{router_forward.1} parent=5 // pred_check
        _
      $region10: #{router_forward.1} parent=5 // pred_check_branch
        %164 = sbr.rel (%p161) target = $region12
      $region11: #{router_forward.1} parent=5 // pred_region
        %s165 = ssub.s32 %s15, 1
        // Predicated region
        $region13: #{router_forward.1} parent=11 // pred_check
          %p166 = pneg %p62
        $region14: #{router_forward.1} parent=11 // pred_check_branch
          %168 = sbr.rel (%p166) target = $region16
        $region15: #{router_forward.1} parent=11 // pred_region
          _
        $region16: #{router_forward.1} parent=11 // pred_fallthru
          _
        // Predicated region
        $region17: #{router_forward.1} parent=11 // pred_check
          %p169 = pneg %p83
        $region18: #{router_forward.1} parent=11 // pred_check_branch
          %171 = sbr.rel (%p169) target = $region20
        $region19: #{router_forward.1} parent=11 // pred_region
          _
        $region20: #{router_forward.1} parent=11 // pred_fallthru
          _
        // Predicated region
        $region21: #{router_forward.1} parent=11 // pred_check
          %p172 = pneg %p104
        $region22: #{router_forward.1} parent=11 // pred_check_branch
          %174 = sbr.rel (%p172) target = $region24
        $region23: #{router_forward.1} parent=11 // pred_region
          _
        $region24: #{router_forward.1} parent=11 // pred_fallthru
          _
        // Predicated region
        $region25: #{router_forward.1} parent=11 // pred_check
          %p175 = pneg %p125
        $region26: #{router_forward.1} parent=11 // pred_check_branch
          %177 = sbr.rel (%p175) target = $region28
        $region27: #{router_forward.1} parent=11 // pred_region
          _
        $region28: #{router_forward.1} parent=11 // pred_fallthru
          _
      $region12: #{router_forward.1} parent=5 // pred_fallthru
        _
      %p178 = scmp.lt.s32.totalorder %s15, 2
      // Predicated region
      $region29: #{router_forward.1} parent=5 // pred_check
        %p179 = pneg %p178
      $region30: #{router_forward.1} parent=5 // pred_check_branch
        %181 = sbr.rel (%p179) target = $region32
      $region31: #{router_forward.1} parent=5 // pred_region
        // Predicated region
        $region33: #{router_forward.1} parent=31 // pred_check
          %p182 = pneg %p35
        $region34: #{router_forward.1} parent=31 // pred_check_branch
          %184 = sbr.rel (%p182) target = $region36
        $region35: #{router_forward.1} parent=31 // pred_region
          %p185 = scmp.lt.s32.totalorder %s15, 1
          %s186 = scalar_select %p185, %s15, 1
          %s187 = smul.addr %s186, 8
          %s188 = scalar_lea.vmem %s0, %s187
        $region36: #{router_forward.1} parent=31 // pred_fallthru
          _
      $region32: #{router_forward.1} parent=5 // pred_fallthru
        _
      %p189 = scmp.le.s32.totalorder 1, %s15
      %p190 = scmp.lt.s32.totalorder %s15, 3
      %p191 = pnand %p189, %p190
      %p192 = pneg %p191
      // Predicated region
      $region37: #{router_forward.1} parent=5 // pred_check
        _
      $region38: #{router_forward.1} parent=5 // pred_check_branch
        %194 = sbr.rel (%p191) target = $region40
      $region39: #{router_forward.1} parent=5 // pred_region
        %s195 = ssub.s32 %s15, 1
        %p196 = scmp.lt.s32.totalorder %s20, 1
        %s197 = scalar_select %p196, %s20, 1
        %s198 = smul.addr %s197, 8
        %s199 = scalar_lea.vmem %s0, %s198
        %p200 = pneg %p41
        %p201 = pneg %p38
        %p202 = pneg %p62
        %p203 = pneg %p59
        %p204 = pneg %p83
        %p205 = pneg %p80
        %p206 = pneg %p104
        %p207 = pneg %p101
        %p208 = pneg %p125
        %p209 = pneg %p122
        %p210 = pneg %p151
        %p211 = pneg %p148
        %s212 = sand.u32 %s138, 1
        %s213 = scalar_lea.sflag [#allocation4], %s212
        %s214 = sand.u32 %s138, 1
        %s215 = scalar_lea.vmem [#allocation3], %s214
        %p216 = scmp.lt.s32.totalorder %s20, 1
        %s217 = scalar_select %p216, %s20, 1
        %s218 = smul.addr %s217, 8
        %s219 = scalar_lea.vmem %s0, %s218
        %v220 = vld [vmem:[%s219] sm:$0xff]
        %v221 = vld [vmem:[%s1] sm:$0xff]
        %v222 = vld [vmem:[%s1 + $0x8] sm:$0xff]
        %v223 = vld [vmem:[%s1 + $0x10] sm:$0xff]
        %v224 = vld [vmem:[%s1 + $0x18] sm:$0xff]
        %v225 = vld [vmem:[%s2] sm:$0x1]
        %v227 = vlaneseq
        %v228 = vshrl.u32 %v227, 7
        %v229 = vsub.s32 0, %v228
        %v230 = vrot.slane %v225, %v229
        %vm232 = vcmask 261120
        %v234 = vsel %vm232, %v220, 0
        %236 = vmatprep.subr.mxu0 0.0
        %237 = vmatpush1.msra.mxu0 %v221
        %238 = vmatprep.subr.mxu0 0.0
        %239 = vmatpush1.msra.mxu0 %v222
        %240 = vmatprep.subr.mxu0 0.0
        %241 = vmatpush1.msra.mxu0 %v223
        %242 = vmatprep.subr.mxu0 0.0
        %243 = vmatpush1.msra.mxu0 %v224
        %244 = vmatprep.subr.mxu0 0.0
        %245 = vmatpush1.msra.mxu0 0.0
        %246 = vmatprep.subr.mxu0 0.0
        %247 = vmatpush1.msra.mxu0 0.0
        %248 = vmatprep.subr.mxu0 0.0
        %249 = vmatpush1.msra.mxu0 0.0
        %250 = vmatprep.subr.mxu0 0.0
        %251 = vmatpush1.msra.mxu0 0.0
        %252 = vmatprep.subr.mxu0 0.0
        %253 = vmatpush1.msra.mxu0 0.0
        %254 = vmatprep.subr.mxu0 0.0
        %255 = vmatpush1.msra.mxu0 0.0
        %256 = vmatprep.subr.mxu0 0.0
        %257 = vmatpush1.msra.mxu0 0.0
        %258 = vmatprep.subr.mxu0 0.0
        %259 = vmatpush1.msra.mxu0 0.0
        %260 = vmatprep.subr.mxu0 0.0
        %261 = vmatpush1.msra.mxu0 0.0
        %262 = vmatprep.subr.mxu0 0.0
        %263 = vmatpush1.msra.mxu0 0.0
        %264 = vmatprep.subr.mxu0 0.0
        %265 = vmatpush1.msra.mxu0 0.0
        %266 = vmatprep.subr.mxu0 0.0
        %267 = vmatpush1.msra.mxu0 0.0
        %268 = vmatprep.subr.mxu0 0.0
        %269 = vmatpush1.msra.mxu0 0.0
        %270 = vmatprep.subr.mxu0 0.0
        %271 = vmatpush1.msra.mxu0 0.0
        %272 = vmatprep.subr.mxu0 0.0
        %273 = vmatpush1.msra.mxu0 0.0
        %274 = vmatprep.subr.mxu0 0.0
        %275 = vmatpush1.msra.mxu0 0.0
        %276 = vmatprep.subr.mxu0 0.0
        %277 = vmatpush1.msra.mxu0 0.0
        %278 = vmatprep.subr.mxu0 0.0
        %279 = vmatpush1.msra.mxu0 0.0
        %280 = vmatprep.subr.mxu0 0.0
        %281 = vmatpush1.msra.mxu0 0.0
        %282 = vmatprep.subr.mxu0 0.0
        %283 = vmatpush1.msra.mxu0 0.0
        %284 = vmatprep.subr.mxu0 0.0
        %285 = vmatpush1.msra.mxu0 0.0
        %286 = vmatprep.subr.mxu0 0.0
        %287 = vmatpush1.msra.mxu0 0.0
        %288 = vmatprep.subr.mxu0 0.0
        %289 = vmatpush1.msra.mxu0 0.0
        %290 = vmatprep.subr.mxu0 0.0
        %291 = vmatpush1.msra.mxu0 0.0
        %292 = vmatprep.subr.mxu0 0.0
        %293 = vmatpush1.msra.mxu0 0.0
        %294 = vmatprep.subr.mxu0 0.0
        %295 = vmatpush1.msra.mxu0 0.0
        %296 = vmatprep.subr.mxu0 0.0
        %297 = vmatpush1.msra.mxu0 0.0
        %298 = vmatprep.subr.mxu0 0.0
        %299 = vmatpush1.msra.mxu0 0.0
        %300 = vmatprep.mubr.f32.mxu0 0.0
        %301 = vmatmul.mubr.f32.gmra.mrb[0].mxu0 %v234
        %v302 = vpop.f32.mrb[0].mxu0
        %v303 = vadd.f32 %v230, %v302
        %v304 = vpop.f32.mrb[0].mxu0
        %305 = vdwg.mxu0
        %v306 = vlaneseq
        %v307 = vand.u32 %v306, 127
        %vm308 = vcmp.lt.s32.totalorder %v307, 16
        %v309 = vmax.f32 %v303, 0.0
        %v310 = vsel %vm308, %v309, %v303
        %v311 = vld [vmem:[%s3] sm:$0x1]
        %s312 = sld [smem:[#allocation2]]
        %v313 = vstv %s312
        %vm314 = vcmask 138240
        %v316 = vsel %vm314, %v311, 0
        %v319 = vsel %vm314, %v310, 0
        %321 = vmatprep.subr.mxu0 0.0
        %322 = vmatpush1.xpose.msra.mxu0 %v319
        %323 = vmatprep.subr.mxu0 0.0
        %324 = vmatpush1.xpose.msra.mxu0 0.0
        %325 = vmatprep.subr.mxu0 0.0
        %326 = vmatpush1.xpose.msra.mxu0 0.0
        %327 = vmatprep.subr.mxu0 0.0
        %328 = vmatpush1.xpose.msra.mxu0 0.0
        %329 = vmatprep.subr.mxu0 0.0
        %330 = vmatpush1.xpose.msra.mxu0 0.0
        %331 = vmatprep.subr.mxu0 0.0
        %332 = vmatpush1.xpose.msra.mxu0 0.0
        %333 = vmatprep.subr.mxu0 0.0
        %334 = vmatpush1.xpose.msra.mxu0 0.0
        %335 = vmatprep.subr.mxu0 0.0
        %336 = vmatpush1.xpose.msra.mxu0 0.0
        %337 = vmatprep.subr.mxu0 0.0
        %338 = vmatpush1.xpose.msra.mxu0 0.0
        %339 = vmatprep.subr.mxu0 0.0
        %340 = vmatpush1.xpose.msra.mxu0 0.0
        %341 = vmatprep.subr.mxu0 0.0
        %342 = vmatpush1.xpose.msra.mxu0 0.0
        %343 = vmatprep.subr.mxu0 0.0
        %344 = vmatpush1.xpose.msra.mxu0 0.0
        %345 = vmatprep.subr.mxu0 0.0
        %346 = vmatpush1.xpose.msra.mxu0 0.0
        %347 = vmatprep.subr.mxu0 0.0
        %348 = vmatpush1.xpose.msra.mxu0 0.0
        %349 = vmatprep.subr.mxu0 0.0
        %350 = vmatpush1.xpose.msra.mxu0 0.0
        %351 = vmatprep.subr.mxu0 0.0
        %352 = vmatpush1.xpose.msra.mxu0 0.0
        %353 = vmatprep.subr.mxu0 0.0
        %354 = vmatpush1.xpose.msra.mxu0 0.0
        %355 = vmatprep.subr.mxu0 0.0
        %356 = vmatpush1.xpose.msra.mxu0 0.0
        %357 = vmatprep.subr.mxu0 0.0
        %358 = vmatpush1.xpose.msra.mxu0 0.0
        %359 = vmatprep.subr.mxu0 0.0
        %360 = vmatpush1.xpose.msra.mxu0 0.0
        %361 = vmatprep.subr.mxu0 0.0
        %362 = vmatpush1.xpose.msra.mxu0 0.0
        %363 = vmatprep.subr.mxu0 0.0
        %364 = vmatpush1.xpose.msra.mxu0 0.0
        %365 = vmatprep.subr.mxu0 0.0
        %366 = vmatpush1.xpose.msra.mxu0 0.0
        %367 = vmatprep.subr.mxu0 0.0
        %368 = vmatpush1.xpose.msra.mxu0 0.0
        %369 = vmatprep.subr.mxu0 0.0
        %370 = vmatpush1.xpose.msra.mxu0 0.0
        %371 = vmatprep.subr.mxu0 0.0
        %372 = vmatpush1.xpose.msra.mxu0 0.0
        %373 = vmatprep.subr.mxu0 0.0
        %374 = vmatpush1.xpose.msra.mxu0 0.0
        %375 = vmatprep.subr.mxu0 0.0
        %376 = vmatpush1.xpose.msra.mxu0 0.0
        %377 = vmatprep.subr.mxu0 0.0
        %378 = vmatpush1.xpose.msra.mxu0 0.0
        %379 = vmatprep.subr.mxu0 0.0
        %380 = vmatpush1.xpose.msra.mxu0 0.0
        %381 = vmatprep.subr.mxu0 0.0
        %382 = vmatpush1.xpose.msra.mxu0 0.0
        %383 = vmatprep.subr.mxu0 0.0
        %384 = vmatpush1.xpose.msra.mxu0 0.0
        %385 = vmatprep.mubr.f32.mxu0 0.0
        %386 = vmatmul.mubr.f32.gmra.mrb[0].mxu0 %v316
        %v387 = vpop.f32.mrb[0].mxu0
        %v388 = vadd.f32 %v313, %v387
        %v389 = vpop.f32.mrb[0].mxu0
        %390 = vdwg.mxu0
        %v391 = vxor.u32 %v388, 2147483648
        %v392 = vmul.f32 %v391, 1.442695
        %v393 = vpow.pop %v392
        %v394 = vadd.f32 %v393, 1.0
        %v395 = vrcp.pop %v394
        %v396 = vmul.f32 1.0, %v395
        %vm397 = vcmask 57344
        %398 = vst.msk [vmem:[%s215] sm:$0x1] %vm397, %v396
        %s399 = sand.u32 %s138, 1
        %s400 = scalar_lea.sflag [#allocation4], %s399
        %s401 = sand.u32 %s138, 1
        %s402 = scalar_lea.vmem [#allocation3], %s401
        // Predicated region
        $region41: #{router_forward.1} parent=39 // pred_check
          %p403 = pneg %p148
        $region42: #{router_forward.1} parent=39 // pred_check_branch
          %405 = sbr.rel (%p403) target = $region44
        $region43: #{router_forward.1} parent=39 // pred_region
          %s407 = ssub.s32 16, 16
          %408 = vsyncadd %s400, %s407
          %s409 = smul.addr %s20, 16
          %s410 = scalar_lea.hbm %s5, %s409
          %s412 = sshll.u32 %s402, 4
          %s413 = int_to_ptr.vmem [resolvable:$true] %s412
          %415 = dma.vmem_to_hbm [thread:$0]  %s413, 16, %s410, %s400
        $region44: #{router_forward.1} parent=39 // pred_fallthru
          _
      $region40: #{router_forward.1} parent=5 // pred_fallthru
        _
      %p416 = scmp.le.s32.totalorder 2, %s15
      // Predicated region
      $region45: #{router_forward.1} parent=5 // pred_check
        %p417 = pneg %p416
      $region46: #{router_forward.1} parent=5 // pred_check_branch
        %419 = sbr.rel (%p417) target = $region48
      $region47: #{router_forward.1} parent=5 // pred_region
        %s420 = ssub.s32 %s15, 2
        // Predicated region
        $region49: #{router_forward.1} parent=47 // pred_check
          %p421 = pneg %p154
        $region50: #{router_forward.1} parent=47 // pred_check_branch
          %423 = sbr.rel (%p421) target = $region52
        $region51: #{router_forward.1} parent=47 // pred_region
          %s424 = sand.u32 %s139, 1
          %s425 = scalar_lea.sflag [#allocation4], %s424
          %s426 = sand.u32 %s139, 1
          %s427 = scalar_lea.vmem [#allocation3], %s426
          %428 = dma.done %s425, 16
        $region52: #{router_forward.1} parent=47 // pred_fallthru
          _
      $region48: #{router_forward.1} parent=5 // pred_fallthru
        _
    $region6: #{router_forward.1} parent=1 // loop_footer
      %s19 = sadd.s32 1, %s15
    $region7: #{router_forward.1} parent=1 // loop_footer_branch
      %14 = sbr.rel target = $region3
    $region8: #{router_forward.1} parent=1 // loop_exit
      _
    %429 = vsyncpa [#allocation4], 1
    %s430 = scalar_lea.sflag [#allocation4], 1
    %431 = vsyncpa %s430, 1

</llo_original>
